<compile_context>
chip_gen: v7x
topology: tpu7x:2x2x1
jax: 0.10.0
libtpu: 0.0.40
codegen_flags: <defaults>
</compile_context>

<pallas_src>
import jax
import jax.numpy as jnp
from jax.experimental import pallas as pl
from jax.experimental.pallas import tpu as pltpu


_COMPUTE_DTYPE = jnp.bfloat16  # cast-at-boundary dtype (f32 accumulation kept)


def _fused_linear_kernel(x_ref, w_ref, b_ref, o_ref):
    # x_ref: (TM, Fp) compute dtype | w_ref: (Fp, Fp) compute dtype
    # b_ref: (1, Fp) f32            | o_ref: (TM, Fp) caller dtype
    acc = jnp.dot(x_ref[...], w_ref[...], preferred_element_type=jnp.float32)
    o_ref[...] = (acc + b_ref[...]).astype(o_ref.dtype)


@jax.jit
def classic_encoder_forward(x, wb, bb, w1, b1):
    """x: (B, S, F). wb/w1: (F, F) in PyTorch (out, in) convention; bb/b1: (F,)."""
    B, S, F = x.shape
    R = B * S

    # ---- fuse residual + two linears (exact: base_model stand-in is linear) ----
    eye = jnp.eye(F, dtype=jnp.float32)
    w_fused = (eye + wb.T.astype(jnp.float32)) @ w1.T.astype(jnp.float32)  # (F, F) in->out
    b_fused = bb.astype(jnp.float32) @ w1.T.astype(jnp.float32) + b1.astype(jnp.float32)

    # ---- lane-dense packing: P logical rows per physical 128-lane row ----
    if F < 128 and 128 % F == 0 and R % (128 // F) == 0:
        P = 128 // F
    else:
        P = 1
    Fp = P * F
    Rs = R // P

    if P > 1:
        # block-diagonal expansion keeps the packed matmul exactly per-row
        w_big = jnp.kron(jnp.eye(P, dtype=jnp.float32), w_fused)  # (Fp, Fp)
        b_big = jnp.tile(b_fused, P)                              # (Fp,)
    else:
        w_big, b_big = w_fused, b_fused

    x_slab = x.reshape(Rs, Fp).astype(_COMPUTE_DTYPE)
    w_big = w_big.astype(_COMPUTE_DTYPE)
    b_big = b_big.reshape(1, Fp).astype(jnp.float32)

    # ---- row tiling: full extent when small, else a large multiple-of-8 tile ----
    TM = Rs if Rs <= 512 else 512
    grid = (pl.cdiv(Rs, TM),)

    in_bytes = Rs * Fp * jnp.dtype(_COMPUTE_DTYPE).itemsize
    out_bytes = Rs * Fp * jnp.dtype(x.dtype).itemsize
    w_bytes = Fp * Fp * jnp.dtype(_COMPUTE_DTYPE).itemsize + Fp * 4
    cost = pl.CostEstimate(
        flops=2 * Rs * Fp * Fp,
        transcendentals=0,
        bytes_accessed=in_bytes + out_bytes + w_bytes,
    )

    out_slab = pl.pallas_call(
        _fused_linear_kernel,
        out_shape=jax.ShapeDtypeStruct((Rs, Fp), x.dtype),
        grid=grid,
        in_specs=[
            pl.BlockSpec((TM, Fp), lambda i: (i, 0)),   # streamed row tiles
            pl.BlockSpec((Fp, Fp), lambda i: (0, 0)),   # weights stay VMEM-resident
            pl.BlockSpec((1, Fp), lambda i: (0, 0)),    # bias stays VMEM-resident
        ],
        out_specs=pl.BlockSpec((TM, Fp), lambda i: (i, 0)),
        compiler_params=pltpu.CompilerParams(
            dimension_semantics=("parallel",),          # shards row tiles across TCs
            vmem_limit_bytes=32 * 1024 * 1024,
        ),
        cost_estimate=cost,
    )(x_slab, w_big, b_big)

    return out_slab.reshape(B, S, F)


def _init_linear(key, fan_in, fan_out):
    # mimic PyTorch nn.Linear default init: U(-1/sqrt(fan_in), 1/sqrt(fan_in))
    kw, kb = jax.random.split(key)
    bound = 1.0 / (fan_in ** 0.5)
    w = jax.random.uniform(kw, (fan_out, fan_in), jnp.float32, -bound, bound)
    b = jax.random.uniform(kb, (fan_out,), jnp.float32, -bound, bound)
    return w, b


if __name__ == "__main__":
    B, S, F = 2, 8, 32  # batch, seq, num_feature (num_head unused by linear stand-in)

    key = jax.random.PRNGKey(0)
    k_x, k_base, k_fc1 = jax.random.split(key, 3)

    x = jax.random.normal(k_x, (B, S, F), jnp.float32)
    wb, bb = _init_linear(k_base, F, F)   # base_model stand-in weights
    w1, b1 = _init_linear(k_fc1, F, F)    # fc1 weights

    out = classic_encoder_forward(x, wb, bb, w1, b1)
    jax.block_until_ready(out)

    # reference in f32 (unfused module semantics); tolerance accounts for bf16
    # inputs/weights with f32 accumulation inside the kernel.
    h_ref = x @ wb.T + bb
    y_ref = x + h_ref
    out_ref = y_ref @ w1.T + b1
    max_err = float(jnp.max(jnp.abs(out - out_ref)))
    assert out.shape == (B, S, F)
    assert max_err < 1e-1, f"mismatch vs reference: max abs err {max_err}"

    print("KERNEL_OK")
</pallas_src>

<mosaic_0001>
module attributes {stable_mosaic.version = 11 : i64} {
  func.func @_fused_linear_kernel(%arg0: i32, %arg1: memref<4x128xbf16, #tpu.memory_space<vmem>>, %arg2: memref<128x128xbf16, #tpu.memory_space<vmem>>, %arg3: memref<1x128xf32, #tpu.memory_space<vmem>>, %arg4: memref<4x128xf32, #tpu.memory_space<vmem>>) attributes {dimension_semantics = [#tpu.dimension_semantics<parallel>], iteration_bounds = array<i64: 1>, scalar_prefetch = 0 : i64, scratch_operands = 0 : i64, tpu.core_type = #tpu.core_type<tc>, window_params = [{transform_indices = @transform_0, window_bounds = array<i64: 4, 128>}, {pipeline_mode = #tpu.pipeline_mode<synchronous>, transform_indices = @transform_1, window_bounds = array<i64: 128, 128>}, {pipeline_mode = #tpu.pipeline_mode<synchronous>, transform_indices = @transform_2, window_bounds = array<i64: 1, 128>}, {transform_indices = @transform_3, window_bounds = array<i64: 4, 128>}]} {
    %c0 = arith.constant 0 : index
    %c0_0 = arith.constant 0 : index
    %0 = vector.load %arg1[%c0, %c0_0] : memref<4x128xbf16, #tpu.memory_space<vmem>>, vector<4x128xbf16>
    %c0_1 = arith.constant 0 : index
    %c0_2 = arith.constant 0 : index
    %1 = vector.load %arg2[%c0_1, %c0_2] : memref<128x128xbf16, #tpu.memory_space<vmem>>, vector<128x128xbf16>
    %cst = arith.constant dense<0.000000e+00> : vector<4x128xf32>
    %2 = tpu.matmul %0, %1, %cst {dimension_numbers = #tpu.dot_dimension_numbers<[1], [0], [0], [1], [0, 0, 1, 1], [], []>} : vector<4x128xbf16>, vector<128x128xbf16>, vector<4x128xf32> -> vector<4x128xf32>
    %c0_3 = arith.constant 0 : index
    %c0_4 = arith.constant 0 : index
    %3 = vector.load %arg3[%c0_3, %c0_4] : memref<1x128xf32, #tpu.memory_space<vmem>>, vector<1x128xf32>
    %4 = vector.broadcast %3 : vector<1x128xf32> to vector<4x128xf32>
    %5 = arith.addf %2, %4 : vector<4x128xf32>
    %c0_5 = arith.constant 0 : index
    %c0_6 = arith.constant 0 : index
    %6 = vector.load %arg4[%c0_5, %c0_6] : memref<4x128xf32, #tpu.memory_space<vmem>>, vector<4x128xf32>
    tpu.vector_store %arg4[%c0_5, %c0_6], %5 {strides = array<i32>} : memref<4x128xf32, #tpu.memory_space<vmem>>, vector<4x128xf32>,
    return
  }
  func.func @transform_0(%arg0: i32) -> (i32, i32) {
    %c0_i32 = arith.constant 0 : i32
    %c0_i32_0 = arith.constant 0 : i32
    return %arg0, %c0_i32 : i32, i32
  }
  func.func @transform_1(%arg0: i32) -> (i32, i32) {
    %c0_i32 = arith.constant 0 : i32
    %c0_i32_0 = arith.constant 0 : i32
    %c0_i32_1 = arith.constant 0 : i32
    return %c0_i32, %c0_i32_0 : i32, i32
  }
  func.func @transform_2(%arg0: i32) -> (i32, i32) {
    %c0_i32 = arith.constant 0 : i32
    %c0_i32_0 = arith.constant 0 : i32
    %c0_i32_1 = arith.constant 0 : i32
    return %c0_i32, %c0_i32_0 : i32, i32
  }
  func.func @transform_3(%arg0: i32) -> (i32, i32) {
    %c0_i32 = arith.constant 0 : i32
    %c0_i32_0 = arith.constant 0 : i32
    return %arg0, %c0_i32 : i32, i32
  }
}

</mosaic_0001>

<llo_original>
// kernel: tile.8
$region0: #{tile.8}
  #allocation0 [shape = 's32[1]{0}', space=sflag, size = 0x4, scoped, tag = 'scoped memory for tile.8']
  %s0 = inlined_call_operand.vmem [shape: f32[32], index: 0, kind: input, shape index: {}]
  %s1 = inlined_call_operand.vmem [shape: f32[4,32], index: 1, kind: output, shape index: {}]
  // Predicated region
  $region2: #{tile.8} parent=0 // pred_check
    _
  $region3: #{tile.8} parent=0 // pred_check_branch
    %3 = sbr.rel (0) target = $region5
  $region4: #{tile.8} parent=0 // pred_region
    _
  $region5: #{tile.8} parent=0 // pred_fallthru
    _
  %v4 = vld [vmem:[%s0] ss:$0 sm:$0xff]
  %5 = vst [vmem:[%s1] sm:$0xf] %v4

// kernel: tile.9
$region0: #{tile.9}
  %s0 = inlined_call_operand.vmem [shape: f32[4,32], index: 0, kind: input, shape index: {}]
  %s1 = inlined_call_operand.vmem [shape: f32[1,128], index: 1, kind: output, shape index: {}]
  $region1: #{tile.9} parent=0
    #allocation0 [shape = 'u8[4096]{0}', space=vmem, size = 0x1000, scoped, tag = 'scoped mem for output reshape']
    #allocation1 [shape = 'u8[4096]{0}', space=vmem, size = 0x1000, scoped, tag = 'scoped mem for input reshape']
    %s3 = sshllo.u32 0, 4
    %v4 = vld [vmem:[%s0] sm:%s3]
    %5 = vst [vmem:[#allocation1] sm:%s3] %v4
    %v6 = vld [vmem:[#allocation1] sm:$0x1]
    %vm7 = vcmask 261120
    %8 = vst.msk [vmem:[#allocation0] sm:$0x1] %vm7, %v6
    %s9 = scalar_lea.vmem [#allocation1], 3
    %v10 = vld [vmem:[%s9] sm:$0x1]
    %11 = vrot.lane.b32.xlu0 %v10, 96
    %v12 = vpop.permute.xlu0 %11
    %vm13 = vcmask 1048320
    %14 = vst.msk [vmem:[#allocation0] sm:$0x1] %vm13, %v12
    %s15 = scalar_lea.vmem [#allocation1], 2
    %v16 = vld [vmem:[%s15] sm:$0x1]
    %17 = vrot.lane.b32.xlu0 %v16, 64
    %v18 = vpop.permute.xlu0 %17
    %vm19 = vcmask 785920
    %20 = vst.msk [vmem:[#allocation0] sm:$0x1] %vm19, %v18
    %s21 = scalar_lea.vmem [#allocation1], 1
    %v22 = vld [vmem:[%s21] sm:$0x1]
    %23 = vrot.lane.b32.xlu0 %v22, 32
    %v24 = vpop.permute.xlu0 %23
    %vm25 = vcmask 523520
    %26 = vst.msk [vmem:[#allocation0] sm:$0x1] %vm25, %v24
    %s28 = sshllo.u32 0, 1
    %v30 = vld [vmem:[#allocation0] sm:%s28]
    %s31 = sshllo.u32 0, 1
    %32 = vst [vmem:[%s1] sm:%s31] %v30

// kernel: classic_encoder_forward.1
$region0: #{classic_encoder_forward.1}
  #allocation0 [shape = 'u32[]', space=smem, size = 0x4, offset = 0x4, fixed_abs, tag = 'smem constant byte address 0x4 - core index']
  #allocation1 [shape = 'u32[144,128]{1,0:T(1,128)}', space=vmem, size = 0x12000, scoped, tag = 'internal scratch']
  %s0 = inlined_call_operand.vmem [shape: bf16[4,128], index: 0, kind: input, shape index: {}]
  %s1 = inlined_call_operand.vmem [shape: bf16[128,128], index: 1, kind: input, shape index: {}]
  %s2 = inlined_call_operand.vmem [shape: f32[1,128], index: 2, kind: input, shape index: {}]
  %s3 = inlined_call_operand.vmem [shape: f32[4,128], index: 3, kind: output, shape index: {}]
  %s4 = sld [smem:[#allocation0]]
  $region22: #{classic_encoder_forward.1} parent=0
    _
  %s6 = ssub.s32 1, %s4
  %s7 = scalar_select 0, %s6, %s4
  // Predicated region
  $region2: #{classic_encoder_forward.1} parent=0 // pred_check
    _
  $region3: #{classic_encoder_forward.1} parent=0 // pred_check_branch
    %9 = sbr.rel (0) target = $region5
  $region4: #{classic_encoder_forward.1} parent=0 // pred_region
    _
  $region5: #{classic_encoder_forward.1} parent=0 // pred_fallthru
    _
  // Predicated region
  $region6: #{classic_encoder_forward.1} parent=0 // pred_check
    _
  $region7: #{classic_encoder_forward.1} parent=0 // pred_check_branch
    %11 = sbr.rel (0) target = $region9
  $region8: #{classic_encoder_forward.1} parent=0 // pred_region
    _
  $region9: #{classic_encoder_forward.1} parent=0 // pred_fallthru
    _
  // Predicated region
  $region10: #{classic_encoder_forward.1} parent=0 // pred_check
    _
  $region11: #{classic_encoder_forward.1} parent=0 // pred_check_branch
    %13 = sbr.rel (0) target = $region13
  $region12: #{classic_encoder_forward.1} parent=0 // pred_region
    _
  $region13: #{classic_encoder_forward.1} parent=0 // pred_fallthru
    _
  %v15 = vld [vmem:[%s0] sm:$0x3]
  %v16 = vld [vmem:[%s1] sm:$0xf]
  %v17 = vld [vmem:[%s1 + $0x4] sm:$0xf]
  %v18 = vld [vmem:[%s1 + $0x8] sm:$0xf]
  %v19 = vld [vmem:[%s1 + $0xc] sm:$0xf]
  %v20 = vld [vmem:[%s1 + $0x10] sm:$0xf]
  %v21 = vld [vmem:[%s1 + $0x14] sm:$0xf]
  %v22 = vld [vmem:[%s1 + $0x18] sm:$0xf]
  %v23 = vld [vmem:[%s1 + $0x1c] sm:$0xf]
  %v24 = vld [vmem:[%s1 + $0x20] sm:$0xf]
  %v25 = vld [vmem:[%s1 + $0x24] sm:$0xf]
  %v26 = vld [vmem:[%s1 + $0x28] sm:$0xf]
  %v27 = vld [vmem:[%s1 + $0x2c] sm:$0xf]
  %v28 = vld [vmem:[%s1 + $0x30] sm:$0xf]
  %v29 = vld [vmem:[%s1 + $0x34] sm:$0xf]
  %v30 = vld [vmem:[%s1 + $0x38] sm:$0xf]
  %v31 = vld [vmem:[%s1 + $0x3c] sm:$0xf]
  %v32 = vld [vmem:[%s2] sm:$0x1]
  %v34 = vlaneseq
  %v35 = vshrl.u32 %v34, 7
  %v36 = vsub.s32 0, %v35
  %v37 = vrot.slane %v32, %v36
  %v55 = vunpack.c.l.b16 %v16
  %v56 = vunpack.c.l.b16 %v17
  %v57 = vunpack.c.l.b16 %v18
  %v58 = vunpack.c.l.b16 %v19
  %v59 = vunpack.c.l.b16 %v20
  %v60 = vunpack.c.l.b16 %v21
  %v61 = vunpack.c.l.b16 %v22
  %v62 = vunpack.c.l.b16 %v23
  %v63 = vunpack.c.l.b16 %v24
  %v64 = vunpack.c.l.b16 %v25
  %v65 = vunpack.c.l.b16 %v26
  %v66 = vunpack.c.l.b16 %v27
  %v67 = vunpack.c.l.b16 %v28
  %v68 = vunpack.c.l.b16 %v29
  %v69 = vunpack.c.l.b16 %v30
  %v70 = vunpack.c.l.b16 %v31
  %v71 = vpack.c.b16 %v56, %v55
  %v72 = vpack.c.b16 %v58, %v57
  %v73 = vpack.c.b16 %v60, %v59
  %v74 = vpack.c.b16 %v62, %v61
  %v75 = vpack.c.b16 %v64, %v63
  %v76 = vpack.c.b16 %v66, %v65
  %v77 = vpack.c.b16 %v68, %v67
  %v78 = vpack.c.b16 %v70, %v69
  %87 = vmatprep.subr.bf16.mxu0 0
  %88 = vmatpush1.bf16.msra.mxu0 %v71
  %89 = vmatprep.subr.bf16.mxu0 0
  %90 = vmatpush1.bf16.msra.mxu0 %v72
  %91 = vmatprep.subr.bf16.mxu0 0
  %92 = vmatpush1.bf16.msra.mxu0 %v73
  %93 = vmatprep.subr.bf16.mxu0 0
  %94 = vmatpush1.bf16.msra.mxu0 %v74
  %95 = vmatprep.subr.bf16.mxu0 0
  %96 = vmatpush1.bf16.msra.mxu0 %v75
  %97 = vmatprep.subr.bf16.mxu0 0
  %98 = vmatpush1.bf16.msra.mxu0 %v76
  %99 = vmatprep.subr.bf16.mxu0 0
  %100 = vmatpush1.bf16.msra.mxu0 %v77
  %101 = vmatprep.subr.bf16.mxu0 0
  %102 = vmatpush1.bf16.msra.mxu0 %v78
  %103 = vmatprep.subr.bf16.mxu0 0
  %104 = vmatpush1.bf16.msra.mxu0 0
  %105 = vmatprep.subr.bf16.mxu0 0
  %106 = vmatpush1.bf16.msra.mxu0 0
  %107 = vmatprep.subr.bf16.mxu0 0
  %108 = vmatpush1.bf16.msra.mxu0 0
  %109 = vmatprep.subr.bf16.mxu0 0
  %110 = vmatpush1.bf16.msra.mxu0 0
  %111 = vmatprep.subr.bf16.mxu0 0
  %112 = vmatpush1.bf16.msra.mxu0 0
  %113 = vmatprep.subr.bf16.mxu0 0
  %114 = vmatpush1.bf16.msra.mxu0 0
  %115 = vmatprep.subr.bf16.mxu0 0
  %116 = vmatpush1.bf16.msra.mxu0 0
  %117 = vmatprep.subr.bf16.mxu0 0
  %118 = vmatpush1.bf16.msra.mxu0 0
  %119 = vmatprep.mubr.bf16.mxu0 0
  %120 = vmatmul.mubr.bf16.gmra.mrb[0].mxu0 %v15
  %v121 = vpop.f32.mrb[0].mxu0
  %v122 = vadd.f32 %v37, %v121
  %v123 = vpop.f32.mrb[0].mxu0
  %v124 = vpop.f32.mrb[0].mxu0
  %v125 = vpop.f32.mrb[0].mxu0
  %126 = vdwg.mxu0
  %127 = vst [vmem:[%s3] sm:$0xf] %v122
  // Predicated region
  $region14: #{classic_encoder_forward.1} parent=0 // pred_check
    _
  $region15: #{classic_encoder_forward.1} parent=0 // pred_check_branch
    %129 = sbr.rel (0) target = $region17
  $region16: #{classic_encoder_forward.1} parent=0 // pred_region
    _
  $region17: #{classic_encoder_forward.1} parent=0 // pred_fallthru
    _
  // Predicated region
  $region18: #{classic_encoder_forward.1} parent=0 // pred_check
    _
  $region19: #{classic_encoder_forward.1} parent=0 // pred_check_branch
    %131 = sbr.rel (0) target = $region21
  $region20: #{classic_encoder_forward.1} parent=0 // pred_region
    _
  $region21: #{classic_encoder_forward.1} parent=0 // pred_fallthru
    _

</llo_original>
